<compile_context>
chip_gen: v6e
topology: v6e:2x2x1
jax: 0.10.0
libtpu: 0.0.40
codegen_flags: <defaults>
</compile_context>

<pallas_src>
import functools

import jax
import jax.numpy as jnp
from jax.experimental import pallas as pl
from jax.experimental.pallas import tpu as pltpu

LEAKY_SLOPE = 0.01  # nn.LeakyReLU default


def _leaky_relu(x):
    return jnp.where(x >= 0, x, LEAKY_SLOPE * x)


def _round_up(n, m):
    return ((n + m - 1) // m) * m


def _pick_tb(B):
    """Batch tile size: exact-fit small tiles for tiny B, big tiles (with >=2-4
    grid steps) for large B."""
    if B <= 256:
        # bf16 packs 2 rows/sublane -> prefer multiples of 16, but fall back to
        # an 8-multiple when that would create an oversized/ragged tile.
        tb = _round_up(B, 16)
        if tb != B:
            tb = _round_up(B, 8)
        return max(8, tb)
    # Large B: amortize per-step overhead with big tiles, cap rows/step at 2048
    # and keep >= ~4 steps so v7x can shard the batch axis across its 2 TCs.
    tb = _round_up(-(-B // 4), 256)
    return max(256, min(2048, tb))


def factor_decoder_kernel(x_ref, w1_ref, b1_ref, w2_ref, b2_ref, w3_ref, b3_ref,
                          out_ref):
    x = x_ref[...]  # bf16 (TB, D_in)

    # fc_1: Linear -> Dropout(identity, eval) -> LeakyReLU
    h1 = jnp.dot(x, w1_ref[...], preferred_element_type=jnp.float32) + b1_ref[...]
    h1 = _leaky_relu(h1)

    # fc_2: Linear -> Dropout(identity, eval) -> LeakyReLU
    h2 = jnp.dot(h1.astype(w2_ref.dtype), w2_ref[...],
                 preferred_element_type=jnp.float32) + b2_ref[...]
    h2 = _leaky_relu(h2)

    # fc_out: Linear -> Sigmoid   (unpadded (TB, D_out) output block)
    h3 = jnp.dot(h2.astype(w3_ref.dtype), w3_ref[...],
                 preferred_element_type=jnp.float32) + b3_ref[...]
    out_ref[...] = jax.nn.sigmoid(h3).astype(out_ref.dtype)


def prepare_decoder_params(params):
    """One-time weight prep: bf16 cast + pad the hidden dim to a 128 multiple.

    Call once and reuse across forward calls (weights don't change per call).
    Zero padding on the hidden dim propagates zeros through leaky_relu and the
    following matmuls, so results are exact.
    """
    w1, b1, w2, b2, w3, b3 = (params["w1"], params["b1"], params["w2"],
                              params["b2"], params["w3"], params["b3"])
    D_in, H = w1.shape
    D_out = w3.shape[1]
    Hp = _round_up(H, 128)

    bf16 = jnp.bfloat16
    f32 = jnp.float32
    w1p = jnp.zeros((D_in, Hp), bf16).at[:, :H].set(w1.astype(bf16))
    w2p = jnp.zeros((Hp, Hp), bf16).at[:H, :H].set(w2.astype(bf16))
    w3p = jnp.zeros((Hp, D_out), bf16).at[:H, :].set(w3.astype(bf16))
    b1p = jnp.zeros((1, Hp), f32).at[:, :H].set(b1.astype(f32).reshape(1, H))
    b2p = jnp.zeros((1, Hp), f32).at[:, :H].set(b2.astype(f32).reshape(1, H))
    b3p = b3.astype(f32).reshape(1, D_out)
    return {"w1": w1p, "b1": b1p, "w2": w2p, "b2": b2p, "w3": w3p, "b3": b3p}


@jax.jit
def factor_decoder(x, prep):
    """x: [B, D_in] float32. prep: output of prepare_decoder_params."""
    B, D_in = x.shape
    D_out = prep["w3"].shape[1]

    TB = _pick_tb(B)
    grid = (pl.cdiv(B, TB),)

    # Only the tiny per-call cast of x happens here (fused under jit).
    xb = x.astype(jnp.bfloat16)

    # Constant index_map -> weights/biases DMA'd once, VMEM-resident across the
    # whole grid.  (pipeline_mode=pl.Buffered(1) would also drop the unused
    # second buffer; omitted — negligible at these sizes.)
    const = lambda a: pl.BlockSpec(a.shape, lambda i: (0, 0))

    return pl.pallas_call(
        factor_decoder_kernel,
        out_shape=jax.ShapeDtypeStruct((B, D_out), jnp.float32),
        grid=grid,
        in_specs=[
            pl.BlockSpec((TB, D_in), lambda i: (i, 0)),  # x: tiled over batch
            const(prep["w1"]), const(prep["b1"]),
            const(prep["w2"]), const(prep["b2"]),
            const(prep["w3"]), const(prep["b3"]),
        ],
        out_specs=pl.BlockSpec((TB, D_out), lambda i: (i, 0)),
        compiler_params=pltpu.CompilerParams(
            dimension_semantics=("parallel",),
            vmem_limit_bytes=16 << 20,
        ),
    )(xb, prep["w1"], prep["b1"], prep["w2"], prep["b2"], prep["w3"], prep["b3"])


def init_params(key, fc_input_dim, expansion_factor, fc_output_dim):
    """Deterministic xavier-normal weights, zero biases (matches initialize_weights)."""
    hidden = fc_input_dim * expansion_factor
    k1, k2, k3 = jax.random.split(key, 3)

    def xavier(k, fan_in, fan_out):
        std = jnp.sqrt(2.0 / (fan_in + fan_out))
        return jax.random.normal(k, (fan_in, fan_out), jnp.float32) * std

    return {
        "w1": xavier(k1, fc_input_dim, hidden),
        "b1": jnp.zeros((1, hidden), jnp.float32),
        "w2": xavier(k2, hidden, hidden),
        "b2": jnp.zeros((1, hidden), jnp.float32),
        "w3": xavier(k3, hidden, fc_output_dim),
        "b3": jnp.zeros((1, fc_output_dim), jnp.float32),
    }


def factor_decoder_ref(x, p):
    h1 = _leaky_relu(x @ p["w1"] + p["b1"])
    h2 = _leaky_relu(h1 @ p["w2"] + p["b2"])
    return jax.nn.sigmoid(h2 @ p["w3"] + p["b3"])


if __name__ == "__main__":
    # Small shapes consistent with the module:
    # fc_input_dim=32, expansion_factor=4 -> hidden=128, fc_output_dim=16, batch=8
    B, D_IN, EXP, D_OUT = 8, 32, 4, 16

    key = jax.random.PRNGKey(0)
    kx, kp = jax.random.split(key)
    x = jax.random.normal(kx, (B, D_IN), jnp.float32)
    params = init_params(kp, D_IN, EXP, D_OUT)

    prep = prepare_decoder_params(params)          # one-time weight prep
    out = factor_decoder(x, prep)
    out = jax.block_until_ready(out)

    ref = factor_decoder_ref(x, params)
    assert out.shape == (B, D_OUT)
    # bf16 matmul operands -> loosened tolerance vs the f32 reference.
    assert jnp.allclose(out, ref, atol=1e-2, rtol=1e-2), "mismatch vs reference"

    print("KERNEL_OK")
</pallas_src>

<mosaic_0001>
module attributes {stable_mosaic.version = 11 : i64} {
  func.func @factor_decoder_kernel(%arg0: i32, %arg1: memref<8x32xbf16, #tpu.memory_space<vmem>>, %arg2: memref<32x128xbf16, #tpu.memory_space<vmem>>, %arg3: memref<1x128xf32, #tpu.memory_space<vmem>>, %arg4: memref<128x128xbf16, #tpu.memory_space<vmem>>, %arg5: memref<1x128xf32, #tpu.memory_space<vmem>>, %arg6: memref<128x16xbf16, #tpu.memory_space<vmem>>, %arg7: memref<1x16xf32, #tpu.memory_space<vmem>>, %arg8: memref<8x16xf32, #tpu.memory_space<vmem>>) attributes {dimension_semantics = [#tpu.dimension_semantics<parallel>], iteration_bounds = array<i64: 1>, scalar_prefetch = 0 : i64, scratch_operands = 0 : i64, tpu.core_type = #tpu.core_type<tc>, window_params = [{transform_indices = @transform_0, window_bounds = array<i64: 8, 32>}, {pipeline_mode = #tpu.pipeline_mode<synchronous>, transform_indices = @transform_1, window_bounds = array<i64: 32, 128>}, {pipeline_mode = #tpu.pipeline_mode<synchronous>, transform_indices = @transform_2, window_bounds = array<i64: 1, 128>}, {pipeline_mode = #tpu.pipeline_mode<synchronous>, transform_indices = @transform_3, window_bounds = array<i64: 128, 128>}, {pipeline_mode = #tpu.pipeline_mode<synchronous>, transform_indices = @transform_4, window_bounds = array<i64: 1, 128>}, {pipeline_mode = #tpu.pipeline_mode<synchronous>, transform_indices = @transform_5, window_bounds = array<i64: 128, 16>}, {pipeline_mode = #tpu.pipeline_mode<synchronous>, transform_indices = @transform_6, window_bounds = array<i64: 1, 16>}, {transform_indices = @transform_7, window_bounds = array<i64: 8, 16>}]} {
    %c0 = arith.constant 0 : index
    %c0_0 = arith.constant 0 : index
    %0 = vector.load %arg1[%c0, %c0_0] : memref<8x32xbf16, #tpu.memory_space<vmem>>, vector<8x32xbf16>
    %c0_1 = arith.constant 0 : index
    %c0_2 = arith.constant 0 : index
    %1 = vector.load %arg2[%c0_1, %c0_2] : memref<32x128xbf16, #tpu.memory_space<vmem>>, vector<32x128xbf16>
    %cst = arith.constant dense<0.000000e+00> : vector<8x128xf32>
    %2 = tpu.matmul %0, %1, %cst {dimension_numbers = #tpu.dot_dimension_numbers<[1], [0], [0], [1], [0, 0, 1, 1], [], []>} : vector<8x32xbf16>, vector<32x128xbf16>, vector<8x128xf32> -> vector<8x128xf32>
    %c0_3 = arith.constant 0 : index
    %c0_4 = arith.constant 0 : index
    %3 = vector.load %arg3[%c0_3, %c0_4] : memref<1x128xf32, #tpu.memory_space<vmem>>, vector<1x128xf32>
    %4 = vector.broadcast %3 : vector<1x128xf32> to vector<8x128xf32>
    %5 = arith.addf %2, %4 : vector<8x128xf32>
    %cst_5 = arith.constant 0.000000e+00 : f32
    %6 = vector.broadcast %cst_5 : f32 to vector<8x128xf32>
    %7 = arith.cmpf oge, %5, %6 : vector<8x128xf32>
    %cst_6 = arith.constant 0.00999999977 : f32
    %8 = vector.broadcast %cst_6 : f32 to vector<8x128xf32>
    %9 = arith.mulf %8, %5 : vector<8x128xf32>
    %10 = arith.select %7, %5, %9 : vector<8x128xi1>, vector<8x128xf32>
    %11 = arith.truncf %10 : vector<8x128xf32> to vector<8x128xbf16>
    %c0_7 = arith.constant 0 : index
    %c0_8 = arith.constant 0 : index
    %12 = vector.load %arg4[%c0_7, %c0_8] : memref<128x128xbf16, #tpu.memory_space<vmem>>, vector<128x128xbf16>
    %cst_9 = arith.constant dense<0.000000e+00> : vector<8x128xf32>
    %13 = tpu.matmul %11, %12, %cst_9 {dimension_numbers = #tpu.dot_dimension_numbers<[1], [0], [0], [1], [0, 0, 1, 1], [], []>} : vector<8x128xbf16>, vector<128x128xbf16>, vector<8x128xf32> -> vector<8x128xf32>
    %c0_10 = arith.constant 0 : index
    %c0_11 = arith.constant 0 : index
    %14 = vector.load %arg5[%c0_10, %c0_11] : memref<1x128xf32, #tpu.memory_space<vmem>>, vector<1x128xf32>
    %15 = vector.broadcast %14 : vector<1x128xf32> to vector<8x128xf32>
    %16 = arith.addf %13, %15 : vector<8x128xf32>
    %cst_12 = arith.constant 0.000000e+00 : f32
    %17 = vector.broadcast %cst_12 : f32 to vector<8x128xf32>
    %18 = arith.cmpf oge, %16, %17 : vector<8x128xf32>
    %cst_13 = arith.constant 0.00999999977 : f32
    %19 = vector.broadcast %cst_13 : f32 to vector<8x128xf32>
    %20 = arith.mulf %19, %16 : vector<8x128xf32>
    %21 = arith.select %18, %16, %20 : vector<8x128xi1>, vector<8x128xf32>
    %22 = arith.truncf %21 : vector<8x128xf32> to vector<8x128xbf16>
    %c0_14 = arith.constant 0 : index
    %c0_15 = arith.constant 0 : index
    %23 = vector.load %arg6[%c0_14, %c0_15] : memref<128x16xbf16, #tpu.memory_space<vmem>>, vector<128x16xbf16>
    %cst_16 = arith.constant dense<0.000000e+00> : vector<8x16xf32>
    %24 = tpu.matmul %22, %23, %cst_16 {dimension_numbers = #tpu.dot_dimension_numbers<[1], [0], [0], [1], [0, 0, 1, 1], [], []>} : vector<8x128xbf16>, vector<128x16xbf16>, vector<8x16xf32> -> vector<8x16xf32>
    %c0_17 = arith.constant 0 : index
    %c0_18 = arith.constant 0 : index
    %25 = vector.load %arg7[%c0_17, %c0_18] : memref<1x16xf32, #tpu.memory_space<vmem>>, vector<1x16xf32>
    %26 = vector.broadcast %25 : vector<1x16xf32> to vector<8x16xf32>
    %27 = arith.addf %24, %26 : vector<8x16xf32>
    %28 = arith.negf %27 : vector<8x16xf32>
    %29 = math.exp %28 : vector<8x16xf32>
    %cst_19 = arith.constant 1.000000e+00 : f32
    %30 = vector.broadcast %cst_19 : f32 to vector<8x16xf32>
    %31 = arith.addf %30, %29 : vector<8x16xf32>
    %32 = arith.divf %30, %31 : vector<8x16xf32>
    %c0_20 = arith.constant 0 : index
    %c0_21 = arith.constant 0 : index
    %33 = vector.load %arg8[%c0_20, %c0_21] : memref<8x16xf32, #tpu.memory_space<vmem>>, vector<8x16xf32>
    tpu.vector_store %arg8[%c0_20, %c0_21], %32 {strides = array<i32>} : memref<8x16xf32, #tpu.memory_space<vmem>>, vector<8x16xf32>,
    return
  }
  func.func @transform_0(%arg0: i32) -> (i32, i32) {
    %c0_i32 = arith.constant 0 : i32
    %c0_i32_0 = arith.constant 0 : i32
    return %arg0, %c0_i32 : i32, i32
  }
  func.func @transform_1(%arg0: i32) -> (i32, i32) {
    %c0_i32 = arith.constant 0 : i32
    %c0_i32_0 = arith.constant 0 : i32
    %c0_i32_1 = arith.constant 0 : i32
    return %c0_i32, %c0_i32_0 : i32, i32
  }
  func.func @transform_2(%arg0: i32) -> (i32, i32) {
    %c0_i32 = arith.constant 0 : i32
    %c0_i32_0 = arith.constant 0 : i32
    %c0_i32_1 = arith.constant 0 : i32
    return %c0_i32, %c0_i32_0 : i32, i32
  }
  func.func @transform_3(%arg0: i32) -> (i32, i32) {
    %c0_i32 = arith.constant 0 : i32
    %c0_i32_0 = arith.constant 0 : i32
    %c0_i32_1 = arith.constant 0 : i32
    return %c0_i32, %c0_i32_0 : i32, i32
  }
  func.func @transform_4(%arg0: i32) -> (i32, i32) {
    %c0_i32 = arith.constant 0 : i32
    %c0_i32_0 = arith.constant 0 : i32
    %c0_i32_1 = arith.constant 0 : i32
    return %c0_i32, %c0_i32_0 : i32, i32
  }
  func.func @transform_5(%arg0: i32) -> (i32, i32) {
    %c0_i32 = arith.constant 0 : i32
    %c0_i32_0 = arith.constant 0 : i32
    %c0_i32_1 = arith.constant 0 : i32
    return %c0_i32, %c0_i32_0 : i32, i32
  }
  func.func @transform_6(%arg0: i32) -> (i32, i32) {
    %c0_i32 = arith.constant 0 : i32
    %c0_i32_0 = arith.constant 0 : i32
    %c0_i32_1 = arith.constant 0 : i32
    return %c0_i32, %c0_i32_0 : i32, i32
  }
  func.func @transform_7(%arg0: i32) -> (i32, i32) {
    %c0_i32 = arith.constant 0 : i32
    %c0_i32_0 = arith.constant 0 : i32
    return %arg0, %c0_i32 : i32, i32
  }
}

</mosaic_0001>

<llo_original>
// kernel: factor_decoder.1
$region0: #{factor_decoder.1}
  #allocation0 [shape = 'u32[]', space=smem, size = 0x4, offset = 0x4, fixed_abs, tag = 'smem constant byte address 0x4 - core index']
  #allocation1 [shape = 'u32[144,128]{1,0:T(1,128)}', space=vmem, size = 0x12000, scoped, tag = 'internal scratch']
  %s0 = inlined_call_operand.vmem [shape: bf16[8,32], index: 0, kind: input, shape index: {}]
  %s1 = inlined_call_operand.vmem [shape: bf16[32,128], index: 1, kind: input, shape index: {}]
  %s2 = inlined_call_operand.vmem [shape: f32[1,128], index: 2, kind: input, shape index: {}]
  %s3 = inlined_call_operand.vmem [shape: bf16[128,128], index: 3, kind: input, shape index: {}]
  %s4 = inlined_call_operand.vmem [shape: f32[1,128], index: 4, kind: input, shape index: {}]
  %s5 = inlined_call_operand.vmem [shape: bf16[128,16], index: 5, kind: input, shape index: {}]
  %s6 = inlined_call_operand.vmem [shape: f32[1,16], index: 6, kind: input, shape index: {}]
  %s7 = inlined_call_operand.hbm [shape: f32[8,16], index: 7, kind: output, shape index: {}]
  %s8 = sld [smem:[#allocation0]]
  $region38: #{factor_decoder.1} parent=0
    _
  %s10 = ssub.s32 1, %s8
  %s11 = scalar_select 0, %s10, %s8
  $region1: #{factor_decoder.1} parent=0
    #allocation2 [shape = 'u8[4096]{0}', space=vmem, size = 0x1000, scoped, tag = 'output window, operand 0, single buffered']
    #allocation3 [shape = 's32[1]{0}', space=sflag, size = 0x4, scoped, tag = 'scoped memory for factor_decoder.1']
    %12 = vsyncpa [#allocation3], 0
    // Predicated region
    $region2: #{factor_decoder.1} parent=1 // pred_check
      _
    $region3: #{factor_decoder.1} parent=1 // pred_check_branch
      %14 = sbr.rel (0) target = $region5
    $region4: #{factor_decoder.1} parent=1 // pred_region
      _
    $region5: #{factor_decoder.1} parent=1 // pred_fallthru
      _
    // Predicated region
    $region6: #{factor_decoder.1} parent=1 // pred_check
      _
    $region7: #{factor_decoder.1} parent=1 // pred_check_branch
      %16 = sbr.rel (0) target = $region9
    $region8: #{factor_decoder.1} parent=1 // pred_region
      _
    $region9: #{factor_decoder.1} parent=1 // pred_fallthru
      _
    // Predicated region
    $region10: #{factor_decoder.1} parent=1 // pred_check
      _
    $region11: #{factor_decoder.1} parent=1 // pred_check_branch
      %18 = sbr.rel (0) target = $region13
    $region12: #{factor_decoder.1} parent=1 // pred_region
      _
    $region13: #{factor_decoder.1} parent=1 // pred_fallthru
      _
    // Predicated region
    $region14: #{factor_decoder.1} parent=1 // pred_check
      _
    $region15: #{factor_decoder.1} parent=1 // pred_check_branch
      %20 = sbr.rel (0) target = $region17
    $region16: #{factor_decoder.1} parent=1 // pred_region
      _
    $region17: #{factor_decoder.1} parent=1 // pred_fallthru
      _
    // Predicated region
    $region18: #{factor_decoder.1} parent=1 // pred_check
      _
    $region19: #{factor_decoder.1} parent=1 // pred_check_branch
      %22 = sbr.rel (0) target = $region21
    $region20: #{factor_decoder.1} parent=1 // pred_region
      _
    $region21: #{factor_decoder.1} parent=1 // pred_fallthru
      _
    // Predicated region
    $region22: #{factor_decoder.1} parent=1 // pred_check
      _
    $region23: #{factor_decoder.1} parent=1 // pred_check_branch
      %24 = sbr.rel (0) target = $region25
    $region24: #{factor_decoder.1} parent=1 // pred_region
      _
    $region25: #{factor_decoder.1} parent=1 // pred_fallthru
      _
    // Predicated region
    $region26: #{factor_decoder.1} parent=1 // pred_check
      _
    $region27: #{factor_decoder.1} parent=1 // pred_check_branch
      %26 = sbr.rel (0) target = $region29
    $region28: #{factor_decoder.1} parent=1 // pred_region
      _
    $region29: #{factor_decoder.1} parent=1 // pred_fallthru
      _
    %v28 = vld [vmem:[%s0] sm:$0xf]
    %v29 = vld [vmem:[%s1] sm:$0xf]
    %v30 = vld [vmem:[%s1 + $0x4] sm:$0xf]
    %v31 = vld [vmem:[%s1 + $0x8] sm:$0xf]
    %v32 = vld [vmem:[%s1 + $0xc] sm:$0xf]
    %v33 = vld [vmem:[%s2] sm:$0x1]
    %v35 = vlaneseq
    %v36 = vshrl.u32 %v35, 7
    %v37 = vsub.s32 0, %v36
    %v38 = vrot.slane %v33, %v37
    %v44 = vunpack.c.l.b16 %v29
    %v45 = vunpack.c.l.b16 %v30
    %v46 = vunpack.c.l.b16 %v31
    %v47 = vunpack.c.l.b16 %v32
    %v48 = vpack.c.b16 %v45, %v44
    %v49 = vpack.c.b16 %v47, %v46
    %vm52 = vcmask 261120
    %v54 = vsel %vm52, %v28, 0
    %56 = vmatprep.subr.bf16.mxu0 0
    %57 = vmatpush1.bf16.msra.mxu0 0
    %58 = vmatprep.subr.bf16.mxu0 0
    %59 = vmatpush1.bf16.msra.mxu0 0
    %60 = vmatprep.subr.bf16.mxu0 0
    %61 = vmatpush1.bf16.msra.mxu0 0
    %62 = vmatprep.subr.bf16.mxu0 0
    %63 = vmatpush1.bf16.msra.mxu0 0
    %64 = vmatprep.subr.bf16.mxu0 0
    %65 = vmatpush1.bf16.msra.mxu0 0
    %66 = vmatprep.subr.bf16.mxu0 0
    %67 = vmatpush1.bf16.msra.mxu0 0
    %68 = vmatprep.subr.bf16.mxu0 0
    %69 = vmatpush1.bf16.msra.mxu0 %v49
    %70 = vmatprep.subr.bf16.mxu0 0
    %71 = vmatpush1.bf16.msra.mxu0 %v48
    %72 = vmatprep.subr.bf16.mxu0 0
    %73 = vmatpush2.bf16.msra.mxu0 0
    %74 = vmatprep.subr.bf16.mxu0 0
    %75 = vmatpush2.bf16.msra.mxu0 0
    %76 = vmatprep.subr.bf16.mxu0 0
    %77 = vmatpush2.bf16.msra.mxu0 0
    %78 = vmatprep.subr.bf16.mxu0 0
    %79 = vmatpush2.bf16.msra.mxu0 0
    %80 = vmatprep.subr.bf16.mxu0 0
    %81 = vmatpush2.bf16.msra.mxu0 0
    %82 = vmatprep.subr.bf16.mxu0 0
    %83 = vmatpush2.bf16.msra.mxu0 0
    %84 = vmatprep.subr.bf16.mxu0 0
    %85 = vmatpush2.bf16.msra.mxu0 0
    %86 = vmatprep.subr.bf16.mxu0 0
    %87 = vmatpush2.bf16.msra.mxu0 0
    %88 = vmatprep.mubr.bf16.mxu0 0
    %89 = vmatmul.mubr.bf16.gmra.mxu0 %v54
    %v90 = vpop.f32.mrf.mxu0
    %v91 = vadd.f32 %v38, %v90
    %v92 = vpop.f32.mrf.mxu0
    %v93 = vpop.f32.mrf.mxu0
    %v94 = vpop.f32.mrf.mxu0
    %95 = vdwg.mxu0
    %vm96 = vcmp.ge.f32.partialorder %v91, 0.0
    %v97 = vmul.f32 %v91, 0.01
    %v98 = vsel %vm96, %v91, %v97
    %v99 = vpack.c.bf16 %v98, %v98
    %v100 = vld [vmem:[%s3] sm:$0xf]
    %v101 = vld [vmem:[%s3 + $0x4] sm:$0xf]
    %v102 = vld [vmem:[%s3 + $0x8] sm:$0xf]
    %v103 = vld [vmem:[%s3 + $0xc] sm:$0xf]
    %v104 = vld [vmem:[%s3 + $0x10] sm:$0xf]
    %v105 = vld [vmem:[%s3 + $0x14] sm:$0xf]
    %v106 = vld [vmem:[%s3 + $0x18] sm:$0xf]
    %v107 = vld [vmem:[%s3 + $0x1c] sm:$0xf]
    %v108 = vld [vmem:[%s3 + $0x20] sm:$0xf]
    %v109 = vld [vmem:[%s3 + $0x24] sm:$0xf]
    %v110 = vld [vmem:[%s3 + $0x28] sm:$0xf]
    %v111 = vld [vmem:[%s3 + $0x2c] sm:$0xf]
    %v112 = vld [vmem:[%s3 + $0x30] sm:$0xf]
    %v113 = vld [vmem:[%s3 + $0x34] sm:$0xf]
    %v114 = vld [vmem:[%s3 + $0x38] sm:$0xf]
    %v115 = vld [vmem:[%s3 + $0x3c] sm:$0xf]
    %v116 = vld [vmem:[%s4] sm:$0x1]
    %v118 = vlaneseq
    %v119 = vshrl.u32 %v118, 7
    %v120 = vsub.s32 0, %v119
    %v121 = vrot.slane %v116, %v120
    %v139 = vunpack.c.l.b16 %v100
    %v140 = vunpack.c.l.b16 %v101
    %v141 = vunpack.c.l.b16 %v102
    %v142 = vunpack.c.l.b16 %v103
    %v143 = vunpack.c.l.b16 %v104
    %v144 = vunpack.c.l.b16 %v105
    %v145 = vunpack.c.l.b16 %v106
    %v146 = vunpack.c.l.b16 %v107
    %v147 = vunpack.c.l.b16 %v108
    %v148 = vunpack.c.l.b16 %v109
    %v149 = vunpack.c.l.b16 %v110
    %v150 = vunpack.c.l.b16 %v111
    %v151 = vunpack.c.l.b16 %v112
    %v152 = vunpack.c.l.b16 %v113
    %v153 = vunpack.c.l.b16 %v114
    %v154 = vunpack.c.l.b16 %v115
    %v155 = vpack.c.b16 %v140, %v139
    %v156 = vpack.c.b16 %v142, %v141
    %v157 = vpack.c.b16 %v144, %v143
    %v158 = vpack.c.b16 %v146, %v145
    %v159 = vpack.c.b16 %v148, %v147
    %v160 = vpack.c.b16 %v150, %v149
    %v161 = vpack.c.b16 %v152, %v151
    %v162 = vpack.c.b16 %v154, %v153
    %171 = vmatprep.subr.bf16.mxu0 0
    %172 = vmatpush1.bf16.msra.mxu0 %v162
    %173 = vmatprep.subr.bf16.mxu0 0
    %174 = vmatpush1.bf16.msra.mxu0 %v161
    %175 = vmatprep.subr.bf16.mxu0 0
    %176 = vmatpush1.bf16.msra.mxu0 %v160
    %177 = vmatprep.subr.bf16.mxu0 0
    %178 = vmatpush1.bf16.msra.mxu0 %v159
    %179 = vmatprep.subr.bf16.mxu0 0
    %180 = vmatpush1.bf16.msra.mxu0 %v158
    %181 = vmatprep.subr.bf16.mxu0 0
    %182 = vmatpush1.bf16.msra.mxu0 %v157
    %183 = vmatprep.subr.bf16.mxu0 0
    %184 = vmatpush1.bf16.msra.mxu0 %v156
    %185 = vmatprep.subr.bf16.mxu0 0
    %186 = vmatpush1.bf16.msra.mxu0 %v155
    %187 = vmatprep.subr.bf16.mxu0 0
    %188 = vmatpush2.bf16.msra.mxu0 0
    %189 = vmatprep.subr.bf16.mxu0 0
    %190 = vmatpush2.bf16.msra.mxu0 0
    %191 = vmatprep.subr.bf16.mxu0 0
    %192 = vmatpush2.bf16.msra.mxu0 0
    %193 = vmatprep.subr.bf16.mxu0 0
    %194 = vmatpush2.bf16.msra.mxu0 0
    %195 = vmatprep.subr.bf16.mxu0 0
    %196 = vmatpush2.bf16.msra.mxu0 0
    %197 = vmatprep.subr.bf16.mxu0 0
    %198 = vmatpush2.bf16.msra.mxu0 0
    %199 = vmatprep.subr.bf16.mxu0 0
    %200 = vmatpush2.bf16.msra.mxu0 0
    %201 = vmatprep.subr.bf16.mxu0 0
    %202 = vmatpush2.bf16.msra.mxu0 0
    %203 = vmatprep.mubr.bf16.mxu0 0
    %204 = vmatmul.mubr.bf16.gmra.mxu0 %v99
    %v205 = vpop.f32.mrf.mxu0
    %v206 = vadd.f32 %v121, %v205
    %v207 = vpop.f32.mrf.mxu0
    %v208 = vpop.f32.mrf.mxu0
    %v209 = vpop.f32.mrf.mxu0
    %210 = vdwg.mxu0
    %vm211 = vcmp.ge.f32.partialorder %v206, 0.0
    %v212 = vmul.f32 %v206, 0.01
    %v213 = vsel %vm211, %v206, %v212
    %v214 = vpack.c.bf16 %v213, %v213
    %v215 = vld [vmem:[%s5] sm:$0xf]
    %v216 = vld [vmem:[%s5 + $0x4] sm:$0xf]
    %v217 = vld [vmem:[%s5 + $0x8] sm:$0xf]
    %v218 = vld [vmem:[%s5 + $0xc] sm:$0xf]
    %v219 = vld [vmem:[%s5 + $0x10] sm:$0xf]
    %v220 = vld [vmem:[%s5 + $0x14] sm:$0xf]
    %v221 = vld [vmem:[%s5 + $0x18] sm:$0xf]
    %v222 = vld [vmem:[%s5 + $0x1c] sm:$0xf]
    %v223 = vld [vmem:[%s5 + $0x20] sm:$0xf]
    %v224 = vld [vmem:[%s5 + $0x24] sm:$0xf]
    %v225 = vld [vmem:[%s5 + $0x28] sm:$0xf]
    %v226 = vld [vmem:[%s5 + $0x2c] sm:$0xf]
    %v227 = vld [vmem:[%s5 + $0x30] sm:$0xf]
    %v228 = vld [vmem:[%s5 + $0x34] sm:$0xf]
    %v229 = vld [vmem:[%s5 + $0x38] sm:$0xf]
    %v230 = vld [vmem:[%s5 + $0x3c] sm:$0xf]
    %v231 = vld [vmem:[%s6] sm:$0x1]
    %v233 = vlaneseq
    %v234 = vshrl.u32 %v233, 7
    %v235 = vsub.s32 0, %v234
    %v236 = vrot.slane %v231, %v235
    %v254 = vunpack.c.l.b16 %v215
    %v255 = vunpack.c.l.b16 %v216
    %v256 = vunpack.c.l.b16 %v217
    %v257 = vunpack.c.l.b16 %v218
    %v258 = vunpack.c.l.b16 %v219
    %v259 = vunpack.c.l.b16 %v220
    %v260 = vunpack.c.l.b16 %v221
    %v261 = vunpack.c.l.b16 %v222
    %v262 = vunpack.c.l.b16 %v223
    %v263 = vunpack.c.l.b16 %v224
    %v264 = vunpack.c.l.b16 %v225
    %v265 = vunpack.c.l.b16 %v226
    %v266 = vunpack.c.l.b16 %v227
    %v267 = vunpack.c.l.b16 %v228
    %v268 = vunpack.c.l.b16 %v229
    %v269 = vunpack.c.l.b16 %v230
    %v270 = vpack.c.b16 %v255, %v254
    %v271 = vpack.c.b16 %v257, %v256
    %v272 = vpack.c.b16 %v259, %v258
    %v273 = vpack.c.b16 %v261, %v260
    %v274 = vpack.c.b16 %v263, %v262
    %v275 = vpack.c.b16 %v265, %v264
    %v276 = vpack.c.b16 %v267, %v266
    %v277 = vpack.c.b16 %v269, %v268
    %286 = vmatprep.subr.bf16.mxu0 0
    %287 = vmatpush1.bf16.msra.mxu0 %v277
    %288 = vmatprep.subr.bf16.mxu0 0
    %289 = vmatpush1.bf16.msra.mxu0 %v276
    %290 = vmatprep.subr.bf16.mxu0 0
    %291 = vmatpush1.bf16.msra.mxu0 %v275
    %292 = vmatprep.subr.bf16.mxu0 0
    %293 = vmatpush1.bf16.msra.mxu0 %v274
    %294 = vmatprep.subr.bf16.mxu0 0
    %295 = vmatpush1.bf16.msra.mxu0 %v273
    %296 = vmatprep.subr.bf16.mxu0 0
    %297 = vmatpush1.bf16.msra.mxu0 %v272
    %298 = vmatprep.subr.bf16.mxu0 0
    %299 = vmatpush1.bf16.msra.mxu0 %v271
    %300 = vmatprep.subr.bf16.mxu0 0
    %301 = vmatpush1.bf16.msra.mxu0 %v270
    %302 = vmatprep.subr.bf16.mxu0 0
    %303 = vmatpush2.bf16.msra.mxu0 0
    %304 = vmatprep.subr.bf16.mxu0 0
    %305 = vmatpush2.bf16.msra.mxu0 0
    %306 = vmatprep.subr.bf16.mxu0 0
    %307 = vmatpush2.bf16.msra.mxu0 0
    %308 = vmatprep.subr.bf16.mxu0 0
    %309 = vmatpush2.bf16.msra.mxu0 0
    %310 = vmatprep.subr.bf16.mxu0 0
    %311 = vmatpush2.bf16.msra.mxu0 0
    %312 = vmatprep.subr.bf16.mxu0 0
    %313 = vmatpush2.bf16.msra.mxu0 0
    %314 = vmatprep.subr.bf16.mxu0 0
    %315 = vmatpush2.bf16.msra.mxu0 0
    %316 = vmatprep.subr.bf16.mxu0 0
    %317 = vmatpush2.bf16.msra.mxu0 0
    %318 = vmatprep.mubr.bf16.mxu0 0
    %319 = vmatmul.mubr.bf16.gmra.mxu0 %v214
    %v320 = vpop.f32.mrf.mxu0
    %v321 = vadd.f32 %v236, %v320
    %v322 = vpop.f32.mrf.mxu0
    %v323 = vpop.f32.mrf.mxu0
    %v324 = vpop.f32.mrf.mxu0
    %325 = vdwg.mxu0
    %v326 = vxor.u32 %v321, 2147483648
    %v327 = vmul.f32 %v326, 1.442695
    %v328 = vpow.pop %v327
    %v329 = vadd.f32 %v328, 1.0
    %v330 = vrcp.pop %v329
    %v331 = vmul.f32 1.0, %v330
    %vm332 = vcmask 130048
    %333 = vst.msk [vmem:[#allocation2] sm:$0xff] %vm332, %v331
    // Predicated region
    $region30: #{factor_decoder.1} parent=1 // pred_check
      _
    $region31: #{factor_decoder.1} parent=1 // pred_check_branch
      %335 = sbr.rel (0) target = $region33
    $region32: #{factor_decoder.1} parent=1 // pred_region
      %s337 = ssub.s32 128, 128
      %338 = vsyncadd [#allocation3], %s337
      %s340 = sshll.u32 [#allocation2], 4
      %s341 = int_to_ptr.vmem [resolvable:$true] %s340
      %343 = dma.vmem_to_hbm [thread:$0]  %s341, 128, %s7, [#allocation3]
    $region33: #{factor_decoder.1} parent=1 // pred_fallthru
      _
    // Predicated region
    $region34: #{factor_decoder.1} parent=1 // pred_check
      _
    $region35: #{factor_decoder.1} parent=1 // pred_check_branch
      %345 = sbr.rel (0) target = $region37
    $region36: #{factor_decoder.1} parent=1 // pred_region
      %346 = dma.done [#allocation3], 128
    $region37: #{factor_decoder.1} parent=1 // pred_fallthru
      _
    %347 = vsyncpa [#allocation3], 1

</llo_original>
